<compile_context>
chip_gen: v6e
topology: v6e:2x2x1
jax: 0.10.0
libtpu: 0.0.40
codegen_flags: <defaults>
</compile_context>

<pallas_src>
import jax
import jax.numpy as jnp
from jax.experimental import pallas as pl
from jax.experimental.pallas import tpu as pltpu

_LANE = 128
_MIB = 1024 * 1024


def _round_up(x, m):
    return (x + m - 1) // m * m


def _cdiv(a, b):
    return (a + b - 1) // b


def _itemsize(dt):
    return jnp.dtype(dt).itemsize


def _physical_vmem_bytes():
    """Per-TensorCore physical VMEM: 128 MiB on v5e/v6e, 64 MiB on v7x."""
    kind = ""
    try:
        kind = jax.devices()[0].device_kind.lower()
    except Exception:
        pass
    default = 64 * _MIB if "7" in kind else 128 * _MIB
    try:
        return int(min(int(pltpu.get_tpu_info().vmem_capacity_bytes), default))
    except Exception:
        return default


def _vmem_budget(physical):
    # ~60% of physical for tiles + resident weights (v7x: ~38 MiB, v5e/v6e: ~76 MiB).
    return min(int(0.60 * physical), 80 * _MIB)


def _feature_granularity(dim, compute_dtype):
    # v6e/v7x MXU is 2x256x256 for bf16: pad large feature dims to 256 so a
    # pass fills the systolic array; tiny dims stay at the 128-lane minimum.
    if jnp.dtype(compute_dtype) == jnp.dtype(jnp.bfloat16) and dim > _LANE:
        return 2 * _LANE
    return _LANE


def _maybe_pad(a, shape, dtype):
    """Cast/pad only when needed (skips full-tensor XLA copies when aligned)."""
    a = jnp.asarray(a)
    if dtype is not None and a.dtype != jnp.dtype(dtype):
        a = a.astype(dtype)
    if a.shape != tuple(shape):
        pads = tuple((0, t - s) for s, t in zip(a.shape, shape))
        a = jnp.pad(a, pads)
    return a


def _plan_features(d_in, d_hid, d_out, compute_dtype, has_bias, block_hid, budget):
    """Pick padded feature dims and (optionally) a hidden-dim tile size."""
    cd_size = _itemsize(compute_dtype)
    d_in_p = _round_up(d_in, _feature_granularity(d_in, compute_dtype))
    d_out_p = _round_up(d_out, _feature_granularity(d_out, compute_dtype))
    gran_hid = _feature_granularity(d_hid, compute_dtype)
    d_hid_full = _round_up(d_hid, gran_hid)

    def resident_bytes(dh):  # weights kept whole & single-buffered in VMEM
        return (cd_size * (d_in_p * dh + dh * d_out_p)
                + 4 * (dh * (2 if has_bias else 1) + d_out_p))

    if block_hid is not None:
        thid = max(gran_hid, _round_up(int(block_hid), gran_hid))
        d_hid_p = _round_up(d_hid, thid)
        return d_in_p, d_hid_p, d_out_p, (None if thid >= d_hid_p else thid)

    if resident_bytes(d_hid_full) <= budget // 2:
        return d_in_p, d_hid_full, d_out_p, None

    # Weights too big to stay fully resident: add a grid axis over D_hid.
    # TODO(synk): a very large input_size would additionally need a D_in
    #             (contraction) grid axis; not implemented here.
    thid = gran_hid
    for mult in (32, 16, 8, 4, 2, 1):
        cand = mult * gran_hid
        if cand >= d_hid_full:
            continue
        step_bytes = (2 * cd_size * cand * (d_in_p + d_out_p)
                      + 2 * 4 * cand * (2 if has_bias else 1) + 4 * d_out_p)
        if step_bytes <= budget // 2:
            thid = cand
            break
    d_hid_p = _round_up(d_hid, thid)
    return d_in_p, d_hid_p, d_out_p, (None if thid >= d_hid_p else thid)


def _make_simple_kernel(has_mask, has_bias):
    """Whole hidden dim resident: one fused fc1+relu(+bias)+fc2 per batch tile."""

    def kernel(*refs):
        it = iter(refs)
        x_ref = next(it)
        mask_ref = next(it) if has_mask else None
        bias_ref = next(it) if has_bias else None
        w1_ref, b1_ref, w2_ref, b2_ref = next(it), next(it), next(it), next(it)
        out_ref, h3_ref = next(it), next(it)

        x = x_ref[...]
        if has_mask:
            x = x * mask_ref[...].astype(x.dtype)      # int8/bf16 mask cast on VPU
        h = jnp.dot(x, w1_ref[...], preferred_element_type=jnp.float32)
        h = jnp.maximum(h + b1_ref[...], 0.0)           # f32 bias add + ReLU
        if has_bias:
            h = h + bias_ref[...]
        h3_ref[...] = h.astype(h3_ref.dtype)
        out = jnp.dot(h.astype(w2_ref.dtype), w2_ref[...],
                      preferred_element_type=jnp.float32)
        out_ref[...] = (out + b2_ref[...]).astype(out_ref.dtype)

    return kernel


def _make_hid_tiled_kernel(has_mask, has_bias):
    """Hidden dim tiled: stream W1 cols / W2 rows, accumulate `out` in f32 scratch."""

    def kernel(*refs):
        it = iter(refs)
        x_ref = next(it)
        mask_ref = next(it) if has_mask else None
        bias_ref = next(it) if has_bias else None
        w1_ref, b1_ref, w2_ref, b2_ref = next(it), next(it), next(it), next(it)
        out_ref, h3_ref = next(it), next(it)
        acc_ref = next(it)

        j = pl.program_id(1)

        @pl.when(j == 0)
        def _():
            acc_ref[...] = jnp.zeros_like(acc_ref)

        x = x_ref[...]
        if has_mask:
            x = x * mask_ref[...].astype(x.dtype)
        h = jnp.dot(x, w1_ref[...], preferred_element_type=jnp.float32)
        h = jnp.maximum(h + b1_ref[...], 0.0)
        if has_bias:
            h = h + bias_ref[...]
        h3_ref[...] = h.astype(h3_ref.dtype)
        acc_ref[...] += jnp.dot(h.astype(w2_ref.dtype), w2_ref[...],
                                preferred_element_type=jnp.float32)

        @pl.when(j == pl.num_programs(1) - 1)
        def _():
            out_ref[...] = (acc_ref[...] + b2_ref[...]).astype(out_ref.dtype)

    return kernel


def prepare_params(w1_t, b1, w2_t, b2, bias=None, *,
                   compute_dtype=jnp.bfloat16, block_hid=None):
    """Pad/cast parameters once at init time (hoists per-call XLA copies).

    Returns (w1_p, b1_p, w2_p, b2_p, bias_p, logical_dims); pass them to
    masked_perceptron_forward together with logical_dims to get unpadded outputs.
    """
    w1_t = jnp.asarray(w1_t)
    w2_t = jnp.asarray(w2_t)
    d_in, d_hid = w1_t.shape
    d_out = w2_t.shape[1]
    cd = jnp.dtype(compute_dtype)
    budget = _vmem_budget(_physical_vmem_bytes())
    d_in_p, d_hid_p, d_out_p, _ = _plan_features(
        d_in, d_hid, d_out, cd, bias is not None, block_hid, budget)
    w1_p = _maybe_pad(w1_t, (d_in_p, d_hid_p), cd)
    w2_p = _maybe_pad(w2_t, (d_hid_p, d_out_p), cd)
    b1_p = _maybe_pad(jnp.reshape(jnp.asarray(b1), (1, -1)), (1, d_hid_p), jnp.float32)
    b2_p = _maybe_pad(jnp.reshape(jnp.asarray(b2), (1, -1)), (1, d_out_p), jnp.float32)
    bias_p = (None if bias is None else
              _maybe_pad(jnp.reshape(jnp.asarray(bias), (1, -1)), (1, d_hid_p),
                         jnp.float32))
    return w1_p, b1_p, w2_p, b2_p, bias_p, (d_in, d_hid, d_out)


def masked_perceptron_forward(x, w1_t, b1, w2_t, b2, mask=None, bias=None, *,
                              block_b=None, block_hid=None,
                              compute_dtype=jnp.bfloat16,
                              out_dtype=jnp.float32, h3_dtype=None,
                              logical_dims=None):
    """Forward pass of MaskedPerceptron.

    x:    [B, D_in]
    w1_t: [D_in, D_hid]   (fc1 weight, pre-transposed; may be pre-padded)
    b1:   [D_hid] or [1, D_hid]
    w2_t: [D_hid, D_out]  (fc2 weight, pre-transposed; may be pre-padded)
    b2:   [D_out] or [1, D_out]
    mask: optional [B, D_in], any numeric dtype (elementwise multiply)
    bias: optional per-feature hidden bias, [D_hid] or [1, D_hid]
    Returns (out [B, D_out] in out_dtype, h3 [B, D_hid] in h3_dtype-or-out_dtype).
    """
    x = jnp.asarray(x)
    w1_t = jnp.asarray(w1_t)
    w2_t = jnp.asarray(w2_t)
    has_mask = mask is not None
    has_bias = bias is not None
    cd = jnp.dtype(compute_dtype)
    out_dtype = jnp.dtype(out_dtype)
    h3_dtype = jnp.dtype(out_dtype if h3_dtype is None else h3_dtype)

    B = x.shape[0]
    if logical_dims is not None:
        D_in, D_hid, D_out = logical_dims
    else:
        D_in, D_hid, D_out = x.shape[1], w1_t.shape[1], w2_t.shape[1]

    physical = _physical_vmem_bytes()
    budget = _vmem_budget(physical)

    d_in_p, d_hid_p, d_out_p, thid = _plan_features(
        D_in, D_hid, D_out, cd, has_bias, block_hid, budget)

    # ---- batch tile selection (real per-operand byte sizes) ----
    cd_size = _itemsize(cd)
    mask_size = _itemsize(jnp.asarray(mask).dtype) if has_mask else 0
    per_row = (cd_size * d_in_p + mask_size * d_in_p
               + _itemsize(out_dtype) * d_out_p
               + _itemsize(h3_dtype) * (d_hid_p if thid is None else thid))
    if thid is None:
        fixed = (cd_size * (d_in_p * d_hid_p + d_hid_p * d_out_p)
                 + 4 * (d_hid_p * (2 if has_bias else 1) + d_out_p))
        acc_per_row = 0
    else:
        fixed = (2 * cd_size * thid * (d_in_p + d_out_p)
                 + 2 * 4 * thid * (2 if has_bias else 1) + 4 * d_out_p)
        acc_per_row = 4 * d_out_p   # f32 out accumulator scratch

    if block_b is not None:
        tm = max(8, _round_up(int(block_b), 8))
    else:
        tm = 512
        while tm > 8 and 2 * tm * per_row + tm * acc_per_row + fixed > budget:
            tm //= 2
        tm = min(tm, _round_up(B, 8))          # don't pad tiny batches to 512 rows
        if B >= 256:
            # Keep >= 2 batch tiles so the "parallel" axis lands on both v7x TCs.
            tm = min(tm, _round_up(_cdiv(B, 2), 8))
        tm = max(tm, 8)
    b_p = _round_up(B, tm)

    # ---- pad/cast only when needed (skipped entirely for aligned inputs) ----
    x_p = _maybe_pad(x, (b_p, d_in_p), cd)
    mask_p = _maybe_pad(mask, (b_p, d_in_p), None) if has_mask else None
    w1_p = _maybe_pad(w1_t, (d_in_p, d_hid_p), cd)
    w2_p = _maybe_pad(w2_t, (d_hid_p, d_out_p), cd)
    b1_p = _maybe_pad(jnp.reshape(jnp.asarray(b1), (1, -1)), (1, d_hid_p), jnp.float32)
    b2_p = _maybe_pad(jnp.reshape(jnp.asarray(b2), (1, -1)), (1, d_out_p), jnp.float32)
    bias_p = (_maybe_pad(jnp.reshape(jnp.asarray(bias), (1, -1)), (1, d_hid_p),
                         jnp.float32) if has_bias else None)

    vmem_limit = int(0.90 * physical)

    def run(single_buffer):
        # Single-buffer operands whose block index never changes (fetched once).
        resident_kw = dict(pipeline_mode=pl.Buffered(1)) if single_buffer else {}

        if thid is None:
            grid = (b_p // tm,)
            bt = lambda d: pl.BlockSpec((tm, d), lambda i: (i, 0))
            res = lambda r, c: pl.BlockSpec((r, c), lambda i: (0, 0), **resident_kw)
            in_specs, args = [bt(d_in_p)], [x_p]
            if has_mask:
                in_specs.append(bt(d_in_p)); args.append(mask_p)
            if has_bias:
                in_specs.append(res(1, d_hid_p)); args.append(bias_p)
            in_specs += [res(d_in_p, d_hid_p), res(1, d_hid_p),
                         res(d_hid_p, d_out_p), res(1, d_out_p)]
            args += [w1_p, b1_p, w2_p, b2_p]
            out_specs = (bt(d_out_p), bt(d_hid_p))
            scratch = []
            dims = ("parallel",)
            kern = _make_simple_kernel(has_mask, has_bias)
        else:
            grid = (b_p // tm, d_hid_p // thid)
            in_specs = [pl.BlockSpec((tm, d_in_p), lambda i, j: (i, 0))]
            args = [x_p]
            if has_mask:
                in_specs.append(pl.BlockSpec((tm, d_in_p), lambda i, j: (i, 0)))
                args.append(mask_p)
            if has_bias:
                in_specs.append(pl.BlockSpec((1, thid), lambda i, j: (0, j)))
                args.append(bias_p)
            in_specs += [
                pl.BlockSpec((d_in_p, thid), lambda i, j: (0, j)),
                pl.BlockSpec((1, thid), lambda i, j: (0, j)),
                pl.BlockSpec((thid, d_out_p), lambda i, j: (j, 0)),
                pl.BlockSpec((1, d_out_p), lambda i, j: (0, 0), **resident_kw),
            ]
            args += [w1_p, b1_p, w2_p, b2_p]
            out_specs = (pl.BlockSpec((tm, d_out_p), lambda i, j: (i, 0)),
                         pl.BlockSpec((tm, thid), lambda i, j: (i, j)))
            scratch = [pltpu.VMEM((tm, d_out_p), jnp.float32)]
            dims = ("parallel", "arbitrary")
            kern = _make_hid_tiled_kernel(has_mask, has_bias)

        out_shape = (jax.ShapeDtypeStruct((b_p, d_out_p), out_dtype),
                     jax.ShapeDtypeStruct((b_p, d_hid_p), h3_dtype))
        return pl.pallas_call(
            kern,
            grid=grid,
            out_shape=out_shape,
            in_specs=in_specs,
            out_specs=out_specs,
            scratch_shapes=scratch,
            compiler_params=pltpu.CompilerParams(
                dimension_semantics=dims,
                vmem_limit_bytes=vmem_limit),
        )(*args)

    try:
        out_p, h3_p = run(True)
    except Exception:
        # pipeline_mode=pl.Buffered(1) not supported by this JAX/Mosaic build:
        # fall back to default (double-buffered) resident specs.
        out_p, h3_p = run(False)

    out = out_p if (b_p == B and d_out_p == D_out) else out_p[:B, :D_out]
    h3 = h3_p if (b_p == B and d_hid_p == D_hid) else h3_p[:B, :D_hid]
    return out, h3


def init_params(key, input_size, hidden_size, output_size):
    """Deterministic init mimicking nn.Linear (uniform +/- 1/sqrt(fan_in))."""
    k1, k2, k3, k4 = jax.random.split(key, 4)
    lim1 = 1.0 / (input_size ** 0.5)
    lim2 = 1.0 / (hidden_size ** 0.5)
    w1_t = jax.random.uniform(k1, (input_size, hidden_size), jnp.float32, -lim1, lim1)
    b1 = jax.random.uniform(k2, (1, hidden_size), jnp.float32, -lim1, lim1)
    w2_t = jax.random.uniform(k3, (hidden_size, output_size), jnp.float32, -lim2, lim2)
    b2 = jax.random.uniform(k4, (1, output_size), jnp.float32, -lim2, lim2)
    return w1_t, b1, w2_t, b2


if __name__ == "__main__":
    key = jax.random.PRNGKey(0)
    kx, km, kb, kp, kx2, kp2 = jax.random.split(key, 6)

    # ---- small MLP: batch=8, input=32, hidden=64, output=16 ----
    B, D_in, D_hid, D_out = 8, 32, 64, 16
    x = jax.random.normal(kx, (B, D_in), jnp.float32)
    mask_i8 = (jax.random.uniform(km, (B, D_in)) > 0.5).astype(jnp.int8)   # 1 B/elem mask
    hidden_bias = jax.random.normal(kb, (1, D_hid), jnp.float32) * 0.1
    w1_t, b1, w2_t, b2 = init_params(kp, D_in, D_hid, D_out)

    # f32 references
    mask_f = mask_i8.astype(jnp.float32)
    h_ref = jnp.maximum((x * mask_f) @ w1_t + b1, 0.0) + hidden_bias
    out_ref = h_ref @ w2_t + b2
    h_ref_nm = jnp.maximum(x @ w1_t + b1, 0.0)
    out_ref_nm = h_ref_nm @ w2_t + b2

    # 1) f32-operand path, params pre-padded once via prepare_params.
    w1p, b1p, w2p, b2p, biasp, dims = prepare_params(
        w1_t, b1, w2_t, b2, bias=hidden_bias, compute_dtype=jnp.float32)
    out_f32, h3_f32 = masked_perceptron_forward(
        x, w1p, b1p, w2p, b2p, mask=mask_i8, bias=biasp,
        compute_dtype=jnp.float32, logical_dims=dims)

    # 2) no-mask / no-bias variant (separate kernel, no synthetic inputs).
    out_nm, h3_nm = masked_perceptron_forward(
        x, w1_t, b1, w2_t, b2, compute_dtype=jnp.float32)

    # 3) default bf16 MXU-operand path (f32 accumulation).
    out_bf, h3_bf = masked_perceptron_forward(
        x, w1_t, b1, w2_t, b2, mask=mask_i8, bias=hidden_bias)
    # bf16-operand reference (same rounding points as the kernel).
    xb = ((x * mask_f).astype(jnp.bfloat16)).astype(jnp.float32)
    w1b = w1_t.astype(jnp.bfloat16).astype(jnp.float32)
    w2b = w2_t.astype(jnp.bfloat16).astype(jnp.float32)
    h_ref_bf = jnp.maximum(xb @ w1b + b1, 0.0) + hidden_bias
    out_ref_bf = h_ref_bf.astype(jnp.bfloat16).astype(jnp.float32) @ w2b + b2

    # 4) hidden-dim-tiled accumulator path (forced via block_hid), f32 operands.
    B2, D_in2, D_hid2, D_out2 = 16, 128, 256, 128
    x2 = jax.random.normal(kx2, (B2, D_in2), jnp.float32)
    w1_t2, b1_2, w2_t2, b2_2 = init_params(kp2, D_in2, D_hid2, D_out2)
    out_t, h3_t = masked_perceptron_forward(
        x2, w1_t2, b1_2, w2_t2, b2_2, compute_dtype=jnp.float32, block_hid=128)
    h_ref2 = jnp.maximum(x2 @ w1_t2 + b1_2, 0.0)
    out_ref2 = h_ref2 @ w2_t2 + b2_2

    jax.block_until_ready((out_f32, h3_f32, out_nm, h3_nm, out_bf, h3_bf, out_t, h3_t))

    assert out_f32.shape == (B, D_out) and h3_f32.shape == (B, D_hid)
    assert jnp.allclose(out_f32, out_ref, atol=1e-4, rtol=1e-4), "out (f32) mismatch"
    assert jnp.allclose(h3_f32, h_ref, atol=1e-4, rtol=1e-4), "h3 (f32) mismatch"
    assert jnp.allclose(out_nm, out_ref_nm, atol=1e-4, rtol=1e-4), "out (no mask) mismatch"
    assert jnp.allclose(h3_nm, h_ref_nm, atol=1e-4, rtol=1e-4), "h3 (no mask) mismatch"
    assert jnp.allclose(out_bf, out_ref_bf, atol=2e-3, rtol=2e-3), "out (bf16) mismatch"
    assert jnp.allclose(h3_bf, h_ref_bf, atol=2e-3, rtol=2e-3), "h3 (bf16) mismatch"
    assert out_t.shape == (B2, D_out2) and h3_t.shape == (B2, D_hid2)
    assert jnp.allclose(out_t, out_ref2, atol=1e-4, rtol=1e-4), "out (hid-tiled) mismatch"
    assert jnp.allclose(h3_t, h_ref2, atol=1e-4, rtol=1e-4), "h3 (hid-tiled) mismatch"

    print("KERNEL_OK")
</pallas_src>

<mosaic_0001>
module attributes {stable_mosaic.version = 11 : i64} {
  func.func @kernel(%arg0: i32, %arg1: memref<8x128xf32, #tpu.memory_space<vmem>>, %arg2: memref<8x128xi8, #tpu.memory_space<vmem>>, %arg3: memref<1x128xf32, #tpu.memory_space<vmem>>, %arg4: memref<128x128xf32, #tpu.memory_space<vmem>>, %arg5: memref<1x128xf32, #tpu.memory_space<vmem>>, %arg6: memref<128x128xf32, #tpu.memory_space<vmem>>, %arg7: memref<1x128xf32, #tpu.memory_space<vmem>>, %arg8: memref<8x128xf32, #tpu.memory_space<vmem>>, %arg9: memref<8x128xf32, #tpu.memory_space<vmem>>) attributes {dimension_semantics = [#tpu.dimension_semantics<parallel>], iteration_bounds = array<i64: 1>, scalar_prefetch = 0 : i64, scratch_operands = 0 : i64, tpu.core_type = #tpu.core_type<tc>, window_params = [{transform_indices = @transform_0, window_bounds = array<i64: 8, 128>}, {transform_indices = @transform_1, window_bounds = array<i64: 8, 128>}, {pipeline_mode = #tpu.pipeline_mode<synchronous>, transform_indices = @transform_2, window_bounds = array<i64: 1, 128>}, {pipeline_mode = #tpu.pipeline_mode<synchronous>, transform_indices = @transform_3, window_bounds = array<i64: 128, 128>}, {pipeline_mode = #tpu.pipeline_mode<synchronous>, transform_indices = @transform_4, window_bounds = array<i64: 1, 128>}, {pipeline_mode = #tpu.pipeline_mode<synchronous>, transform_indices = @transform_5, window_bounds = array<i64: 128, 128>}, {pipeline_mode = #tpu.pipeline_mode<synchronous>, transform_indices = @transform_6, window_bounds = array<i64: 1, 128>}, {transform_indices = @transform_7, window_bounds = array<i64: 8, 128>}, {transform_indices = @transform_8, window_bounds = array<i64: 8, 128>}]} {
    %c0 = arith.constant 0 : index
    %c0_0 = arith.constant 0 : index
    %0 = vector.load %arg1[%c0, %c0_0] : memref<8x128xf32, #tpu.memory_space<vmem>>, vector<8x128xf32>
    %c0_1 = arith.constant 0 : index
    %c0_2 = arith.constant 0 : index
    %1 = vector.load %arg2[%c0_1, %c0_2] : memref<8x128xi8, #tpu.memory_space<vmem>>, vector<8x128xi8>
    %2 = arith.sitofp %1 : vector<8x128xi8> to vector<8x128xf32>
    %3 = arith.mulf %0, %2 : vector<8x128xf32>
    %c0_3 = arith.constant 0 : index
    %c0_4 = arith.constant 0 : index
    %4 = vector.load %arg4[%c0_3, %c0_4] : memref<128x128xf32, #tpu.memory_space<vmem>>, vector<128x128xf32>
    %cst = arith.constant dense<0.000000e+00> : vector<8x128xf32>
    %5 = tpu.matmul %3, %4, %cst {dimension_numbers = #tpu.dot_dimension_numbers<[1], [0], [0], [1], [0, 0, 1, 1], [], []>} : vector<8x128xf32>, vector<128x128xf32>, vector<8x128xf32> -> vector<8x128xf32>
    %c0_5 = arith.constant 0 : index
    %c0_6 = arith.constant 0 : index
    %6 = vector.load %arg5[%c0_5, %c0_6] : memref<1x128xf32, #tpu.memory_space<vmem>>, vector<1x128xf32>
    %7 = vector.broadcast %6 : vector<1x128xf32> to vector<8x128xf32>
    %8 = arith.addf %5, %7 : vector<8x128xf32>
    %cst_7 = arith.constant 0.000000e+00 : f32
    %9 = vector.broadcast %cst_7 : f32 to vector<8x128xf32>
    %10 = arith.maximumf %8, %9 : vector<8x128xf32>
    %c0_8 = arith.constant 0 : index
    %c0_9 = arith.constant 0 : index
    %11 = vector.load %arg3[%c0_8, %c0_9] : memref<1x128xf32, #tpu.memory_space<vmem>>, vector<1x128xf32>
    %12 = vector.broadcast %11 : vector<1x128xf32> to vector<8x128xf32>
    %13 = arith.addf %10, %12 : vector<8x128xf32>
    %c0_10 = arith.constant 0 : index
    %c0_11 = arith.constant 0 : index
    %14 = vector.load %arg9[%c0_10, %c0_11] : memref<8x128xf32, #tpu.memory_space<vmem>>, vector<8x128xf32>
    tpu.vector_store %arg9[%c0_10, %c0_11], %13 {strides = array<i32>} : memref<8x128xf32, #tpu.memory_space<vmem>>, vector<8x128xf32>,
    %c0_12 = arith.constant 0 : index
    %c0_13 = arith.constant 0 : index
    %15 = vector.load %arg6[%c0_12, %c0_13] : memref<128x128xf32, #tpu.memory_space<vmem>>, vector<128x128xf32>
    %cst_14 = arith.constant dense<0.000000e+00> : vector<8x128xf32>
    %16 = tpu.matmul %13, %15, %cst_14 {dimension_numbers = #tpu.dot_dimension_numbers<[1], [0], [0], [1], [0, 0, 1, 1], [], []>} : vector<8x128xf32>, vector<128x128xf32>, vector<8x128xf32> -> vector<8x128xf32>
    %c0_15 = arith.constant 0 : index
    %c0_16 = arith.constant 0 : index
    %17 = vector.load %arg7[%c0_15, %c0_16] : memref<1x128xf32, #tpu.memory_space<vmem>>, vector<1x128xf32>
    %18 = vector.broadcast %17 : vector<1x128xf32> to vector<8x128xf32>
    %19 = arith.addf %16, %18 : vector<8x128xf32>
    %c0_17 = arith.constant 0 : index
    %c0_18 = arith.constant 0 : index
    %20 = vector.load %arg8[%c0_17, %c0_18] : memref<8x128xf32, #tpu.memory_space<vmem>>, vector<8x128xf32>
    tpu.vector_store %arg8[%c0_17, %c0_18], %19 {strides = array<i32>} : memref<8x128xf32, #tpu.memory_space<vmem>>, vector<8x128xf32>,
    return
  }
  func.func @transform_0(%arg0: i32) -> (i32, i32) {
    %c0_i32 = arith.constant 0 : i32
    %c0_i32_0 = arith.constant 0 : i32
    return %arg0, %c0_i32 : i32, i32
  }
  func.func @transform_1(%arg0: i32) -> (i32, i32) {
    %c0_i32 = arith.constant 0 : i32
    %c0_i32_0 = arith.constant 0 : i32
    return %arg0, %c0_i32 : i32, i32
  }
  func.func @transform_2(%arg0: i32) -> (i32, i32) {
    %c0_i32 = arith.constant 0 : i32
    %c0_i32_0 = arith.constant 0 : i32
    %c0_i32_1 = arith.constant 0 : i32
    return %c0_i32, %c0_i32_0 : i32, i32
  }
  func.func @transform_3(%arg0: i32) -> (i32, i32) {
    %c0_i32 = arith.constant 0 : i32
    %c0_i32_0 = arith.constant 0 : i32
    %c0_i32_1 = arith.constant 0 : i32
    return %c0_i32, %c0_i32_0 : i32, i32
  }
  func.func @transform_4(%arg0: i32) -> (i32, i32) {
    %c0_i32 = arith.constant 0 : i32
    %c0_i32_0 = arith.constant 0 : i32
    %c0_i32_1 = arith.constant 0 : i32
    return %c0_i32, %c0_i32_0 : i32, i32
  }
  func.func @transform_5(%arg0: i32) -> (i32, i32) {
    %c0_i32 = arith.constant 0 : i32
    %c0_i32_0 = arith.constant 0 : i32
    %c0_i32_1 = arith.constant 0 : i32
    return %c0_i32, %c0_i32_0 : i32, i32
  }
  func.func @transform_6(%arg0: i32) -> (i32, i32) {
    %c0_i32 = arith.constant 0 : i32
    %c0_i32_0 = arith.constant 0 : i32
    %c0_i32_1 = arith.constant 0 : i32
    return %c0_i32, %c0_i32_0 : i32, i32
  }
  func.func @transform_7(%arg0: i32) -> (i32, i32) {
    %c0_i32 = arith.constant 0 : i32
    %c0_i32_0 = arith.constant 0 : i32
    return %arg0, %c0_i32 : i32, i32
  }
  func.func @transform_8(%arg0: i32) -> (i32, i32) {
    %c0_i32 = arith.constant 0 : i32
    %c0_i32_0 = arith.constant 0 : i32
    return %arg0, %c0_i32 : i32, i32
  }
}

module attributes {stable_mosaic.version = 11 : i64} {
  func.func @kernel(%arg0: i32, %arg1: memref<8x128xf32, #tpu.memory_space<vmem>>, %arg2: memref<8x128xi8, #tpu.memory_space<vmem>>, %arg3: memref<1x128xf32, #tpu.memory_space<vmem>>, %arg4: memref<128x128xf32, #tpu.memory_space<vmem>>, %arg5: memref<1x128xf32, #tpu.memory_space<vmem>>, %arg6: memref<128x128xf32, #tpu.memory_space<vmem>>, %arg7: memref<1x128xf32, #tpu.memory_space<vmem>>, %arg8: memref<8x128xf32, #tpu.memory_space<vmem>>, %arg9: memref<8x128xf32, #tpu.memory_space<vmem>>) attributes {dimension_semantics = [#tpu.dimension_semantics<parallel>], iteration_bounds = array<i64: 1>, scalar_prefetch = 0 : i64, scratch_operands = 0 : i64, tpu.core_type = #tpu.core_type<tc>, window_params = [{transform_indices = @transform_0, window_bounds = array<i64: 8, 128>}, {transform_indices = @transform_1, window_bounds = array<i64: 8, 128>}, {pipeline_mode = #tpu.pipeline_mode<synchronous>, transform_indices = @transform_2, window_bounds = array<i64: 1, 128>}, {pipeline_mode = #tpu.pipeline_mode<synchronous>, transform_indices = @transform_3, window_bounds = array<i64: 128, 128>}, {pipeline_mode = #tpu.pipeline_mode<synchronous>, transform_indices = @transform_4, window_bounds = array<i64: 1, 128>}, {pipeline_mode = #tpu.pipeline_mode<synchronous>, transform_indices = @transform_5, window_bounds = array<i64: 128, 128>}, {pipeline_mode = #tpu.pipeline_mode<synchronous>, transform_indices = @transform_6, window_bounds = array<i64: 1, 128>}, {transform_indices = @transform_7, window_bounds = array<i64: 8, 128>}, {transform_indices = @transform_8, window_bounds = array<i64: 8, 128>}]} {
    %c0 = arith.constant 0 : index
    %c0_0 = arith.constant 0 : index
    %0 = vector.load %arg1[%c0, %c0_0] : memref<8x128xf32, #tpu.memory_space<vmem>>, vector<8x128xf32>
    %c0_1 = arith.constant 0 : index
    %c0_2 = arith.constant 0 : index
    %1 = vector.load %arg2[%c0_1, %c0_2] : memref<8x128xi8, #tpu.memory_space<vmem>>, vector<8x128xi8>
    %2 = arith.sitofp %1 : vector<8x128xi8> to vector<8x128xf32>
    %3 = arith.mulf %0, %2 : vector<8x128xf32>
    %c0_3 = arith.constant 0 : index
    %c0_4 = arith.constant 0 : index
    %4 = vector.load %arg4[%c0_3, %c0_4] : memref<128x128xf32, #tpu.memory_space<vmem>>, vector<128x128xf32>
    %cst = arith.constant dense<0.000000e+00> : vector<8x128xf32>
    %5 = tpu.matmul %3, %4, %cst {dimension_numbers = #tpu.dot_dimension_numbers<[1], [0], [0], [1], [0, 0, 1, 1], [], []>} : vector<8x128xf32>, vector<128x128xf32>, vector<8x128xf32> -> vector<8x128xf32>
    %c0_5 = arith.constant 0 : index
    %c0_6 = arith.constant 0 : index
    %6 = vector.load %arg5[%c0_5, %c0_6] : memref<1x128xf32, #tpu.memory_space<vmem>>, vector<1x128xf32>
    %7 = vector.broadcast %6 : vector<1x128xf32> to vector<8x128xf32>
    %8 = arith.addf %5, %7 : vector<8x128xf32>
    %cst_7 = arith.constant 0.000000e+00 : f32
    %9 = vector.broadcast %cst_7 : f32 to vector<8x128xf32>
    %10 = arith.maximumf %8, %9 : vector<8x128xf32>
    %c0_8 = arith.constant 0 : index
    %c0_9 = arith.constant 0 : index
    %11 = vector.load %arg3[%c0_8, %c0_9] : memref<1x128xf32, #tpu.memory_space<vmem>>, vector<1x128xf32>
    %12 = vector.broadcast %11 : vector<1x128xf32> to vector<8x128xf32>
    %13 = arith.addf %10, %12 : vector<8x128xf32>
    %c0_10 = arith.constant 0 : index
    %c0_11 = arith.constant 0 : index
    %14 = vector.load %arg9[%c0_10, %c0_11] : memref<8x128xf32, #tpu.memory_space<vmem>>, vector<8x128xf32>
    tpu.vector_store %arg9[%c0_10, %c0_11], %13 {strides = array<i32>} : memref<8x128xf32, #tpu.memory_space<vmem>>, vector<8x128xf32>,
    %c0_12 = arith.constant 0 : index
    %c0_13 = arith.constant 0 : index
    %15 = vector.load %arg6[%c0_12, %c0_13] : memref<128x128xf32, #tpu.memory_space<vmem>>, vector<128x128xf32>
    %cst_14 = arith.constant dense<0.000000e+00> : vector<8x128xf32>
    %16 = tpu.matmul %13, %15, %cst_14 {dimension_numbers = #tpu.dot_dimension_numbers<[1], [0], [0], [1], [0, 0, 1, 1], [], []>} : vector<8x128xf32>, vector<128x128xf32>, vector<8x128xf32> -> vector<8x128xf32>
    %c0_15 = arith.constant 0 : index
    %c0_16 = arith.constant 0 : index
    %17 = vector.load %arg7[%c0_15, %c0_16] : memref<1x128xf32, #tpu.memory_space<vmem>>, vector<1x128xf32>
    %18 = vector.broadcast %17 : vector<1x128xf32> to vector<8x128xf32>
    %19 = arith.addf %16, %18 : vector<8x128xf32>
    %c0_17 = arith.constant 0 : index
    %c0_18 = arith.constant 0 : index
    %20 = vector.load %arg8[%c0_17, %c0_18] : memref<8x128xf32, #tpu.memory_space<vmem>>, vector<8x128xf32>
    tpu.vector_store %arg8[%c0_17, %c0_18], %19 {strides = array<i32>} : memref<8x128xf32, #tpu.memory_space<vmem>>, vector<8x128xf32>,
    return
  }
  func.func @transform_0(%arg0: i32) -> (i32, i32) {
    %c0_i32 = arith.constant 0 : i32
    %c0_i32_0 = arith.constant 0 : i32
    return %arg0, %c0_i32 : i32, i32
  }
  func.func @transform_1(%arg0: i32) -> (i32, i32) {
    %c0_i32 = arith.constant 0 : i32
    %c0_i32_0 = arith.constant 0 : i32
    return %arg0, %c0_i32 : i32, i32
  }
  func.func @transform_2(%arg0: i32) -> (i32, i32) {
    %c0_i32 = arith.constant 0 : i32
    %c0_i32_0 = arith.constant 0 : i32
    %c0_i32_1 = arith.constant 0 : i32
    return %c0_i32, %c0_i32_0 : i32, i32
  }
  func.func @transform_3(%arg0: i32) -> (i32, i32) {
    %c0_i32 = arith.constant 0 : i32
    %c0_i32_0 = arith.constant 0 : i32
    %c0_i32_1 = arith.constant 0 : i32
    return %c0_i32, %c0_i32_0 : i32, i32
  }
  func.func @transform_4(%arg0: i32) -> (i32, i32) {
    %c0_i32 = arith.constant 0 : i32
    %c0_i32_0 = arith.constant 0 : i32
    %c0_i32_1 = arith.constant 0 : i32
    return %c0_i32, %c0_i32_0 : i32, i32
  }
  func.func @transform_5(%arg0: i32) -> (i32, i32) {
    %c0_i32 = arith.constant 0 : i32
    %c0_i32_0 = arith.constant 0 : i32
    %c0_i32_1 = arith.constant 0 : i32
    return %c0_i32, %c0_i32_0 : i32, i32
  }
  func.func @transform_6(%arg0: i32) -> (i32, i32) {
    %c0_i32 = arith.constant 0 : i32
    %c0_i32_0 = arith.constant 0 : i32
    %c0_i32_1 = arith.constant 0 : i32
    return %c0_i32, %c0_i32_0 : i32, i32
  }
  func.func @transform_7(%arg0: i32) -> (i32, i32) {
    %c0_i32 = arith.constant 0 : i32
    %c0_i32_0 = arith.constant 0 : i32
    return %arg0, %c0_i32 : i32, i32
  }
  func.func @transform_8(%arg0: i32) -> (i32, i32) {
    %c0_i32 = arith.constant 0 : i32
    %c0_i32_0 = arith.constant 0 : i32
    return %arg0, %c0_i32 : i32, i32
  }
}

</mosaic_0001>

<llo_original>
// kernel: tpu_custom_call.1
$region0: #{tpu_custom_call.1}
  #allocation0 [shape = 'u32[]', space=smem, size = 0x4, offset = 0x4, fixed_abs, tag = 'smem constant byte address 0x4 - core index']
  #allocation1 [shape = 'u32[144,128]{1,0:T(1,128)}', space=vmem, size = 0x12000, scoped, tag = 'internal scratch']
  %s0 = inlined_call_operand.hbm [shape: f32[8,128], index: 0, kind: input, shape index: {}]
  %s1 = inlined_call_operand.hbm [shape: s8[8,128], index: 1, kind: input, shape index: {}]
  %s2 = inlined_call_operand.vmem [shape: f32[1,128], index: 2, kind: input, shape index: {}]
  %s3 = inlined_call_operand.hbm [shape: f32[128,128], index: 3, kind: input, shape index: {}]
  %s4 = inlined_call_operand.vmem [shape: f32[1,128], index: 4, kind: input, shape index: {}]
  %s5 = inlined_call_operand.hbm [shape: f32[128,128], index: 5, kind: input, shape index: {}]
  %s6 = inlined_call_operand.vmem [shape: f32[1,128], index: 6, kind: input, shape index: {}]
  %s7 = inlined_call_operand.hbm [shape: f32[8,128], index: 7, kind: output, shape index: {0}]
  %s8 = inlined_call_operand.hbm [shape: f32[8,128], index: 8, kind: output, shape index: {1}]
  %9 = xla_tuple %s7, %s8
  %s10 = sld [smem:[#allocation0]]
  $region62: #{tpu_custom_call.1} parent=0
    _
  %s12 = ssub.s32 1, %s10
  %s13 = scalar_select 0, %s12, %s10
  $region1: #{tpu_custom_call.1} parent=0
    #allocation2 [shape = 'u8[4096]{0}', space=vmem, size = 0x1000, scoped, tag = 'input window, operand 0, single buffered']
    #allocation3 [shape = 's32[1]{0}', space=sflag, size = 0x4, scoped, tag = 'scoped memory for tpu_custom_call.1']
    #allocation4 [shape = 's32[1]{0}', space=sflag, size = 0x4, scoped, tag = 'scoped memory for tpu_custom_call.1']
    #allocation5 [shape = 'u8[1024]{0}', space=vmem, size = 0x400, scoped, tag = 'input window, operand 1, single buffered']
    #allocation6 [shape = 's32[1]{0}', space=sflag, size = 0x4, scoped, tag = 'scoped memory for tpu_custom_call.1']
    #allocation7 [shape = 'u8[65536]{0}', space=vmem, size = 0x10000, scoped, tag = 'input window, operand 3, single buffered']
    #allocation8 [shape = 'u8[65536]{0}', space=vmem, size = 0x10000, scoped, tag = 'input window, operand 5, single buffered']
    #allocation9 [shape = 's32[1]{0}', space=sflag, size = 0x4, scoped, tag = 'scoped memory for tpu_custom_call.1']
    #allocation10 [shape = 'u8[4096]{0}', space=vmem, size = 0x1000, scoped, tag = 'output window, operand 0, single buffered']
    #allocation11 [shape = 'u8[4096]{0}', space=vmem, size = 0x1000, scoped, tag = 'output window, operand 1, single buffered']
    #allocation12 [shape = 's32[1]{0}', space=sflag, size = 0x4, scoped, tag = 'scoped memory for tpu_custom_call.1']
    %14 = vsyncpa [#allocation3], 0
    %15 = vsyncpa [#allocation6], 0
    %16 = vsyncpa [#allocation9], 0
    %17 = vsyncpa [#allocation4], 0
    %18 = vsyncpa [#allocation12], 0
    // Predicated region
    $region2: #{tpu_custom_call.1} parent=1 // pred_check
      _
    $region3: #{tpu_custom_call.1} parent=1 // pred_check_branch
      %20 = sbr.rel (0) target = $region5
    $region4: #{tpu_custom_call.1} parent=1 // pred_region
      %s22 = ssub.s32 128, 128
      %23 = vsyncadd [#allocation3], %s22
      %s25 = sshll.u32 [#allocation2], 4
      %s26 = int_to_ptr.vmem [resolvable:$true] %s25
      %28 = dma.hbm_to_vmem [thread:$0]  %s0, 128, %s26, [#allocation3]
    $region5: #{tpu_custom_call.1} parent=1 // pred_fallthru
      _
    // Predicated region
    $region6: #{tpu_custom_call.1} parent=1 // pred_check
      _
    $region7: #{tpu_custom_call.1} parent=1 // pred_check_branch
      %30 = sbr.rel (0) target = $region9
    $region8: #{tpu_custom_call.1} parent=1 // pred_region
      %s32 = ssub.s32 32, 32
      %33 = vsyncadd [#allocation6], %s32
      %s35 = sshll.u32 [#allocation5], 4
      %s36 = int_to_ptr.vmem [resolvable:$true] %s35
      %38 = dma.hbm_to_vmem [thread:$0]  %s1, 32, %s36, [#allocation6]
    $region9: #{tpu_custom_call.1} parent=1 // pred_fallthru
      _
    // Predicated region
    $region10: #{tpu_custom_call.1} parent=1 // pred_check
      _
    $region11: #{tpu_custom_call.1} parent=1 // pred_check_branch
      %40 = sbr.rel (0) target = $region13
    $region12: #{tpu_custom_call.1} parent=1 // pred_region
      _
    $region13: #{tpu_custom_call.1} parent=1 // pred_fallthru
      _
    // Predicated region
    $region14: #{tpu_custom_call.1} parent=1 // pred_check
      _
    $region15: #{tpu_custom_call.1} parent=1 // pred_check_branch
      %42 = sbr.rel (0) target = $region17
    $region16: #{tpu_custom_call.1} parent=1 // pred_region
      %s44 = ssub.s32 2048, 2048
      %45 = vsyncadd [#allocation6], %s44
      %s46 = sshll.u32 [#allocation7], 4
      %s47 = int_to_ptr.vmem [resolvable:$true] %s46
      %52 = dma.hbm_to_vmem [thread:$0]  %s3, 2048, %s47, [#allocation6], 128, 128, 8
    $region17: #{tpu_custom_call.1} parent=1 // pred_fallthru
      _
    // Predicated region
    $region18: #{tpu_custom_call.1} parent=1 // pred_check
      _
    $region19: #{tpu_custom_call.1} parent=1 // pred_check_branch
      %54 = sbr.rel (0) target = $region21
    $region20: #{tpu_custom_call.1} parent=1 // pred_region
      _
    $region21: #{tpu_custom_call.1} parent=1 // pred_fallthru
      _
    // Predicated region
    $region22: #{tpu_custom_call.1} parent=1 // pred_check
      _
    $region23: #{tpu_custom_call.1} parent=1 // pred_check_branch
      %56 = sbr.rel (0) target = $region25
    $region24: #{tpu_custom_call.1} parent=1 // pred_region
      %s58 = ssub.s32 2048, 2048
      %59 = vsyncadd [#allocation9], %s58
      %s60 = sshll.u32 [#allocation8], 4
      %s61 = int_to_ptr.vmem [resolvable:$true] %s60
      %66 = dma.hbm_to_vmem [thread:$0]  %s5, 2048, %s61, [#allocation9], 128, 128, 8
    $region25: #{tpu_custom_call.1} parent=1 // pred_fallthru
      _
    // Predicated region
    $region26: #{tpu_custom_call.1} parent=1 // pred_check
      _
    $region27: #{tpu_custom_call.1} parent=1 // pred_check_branch
      %68 = sbr.rel (0) target = $region29
    $region28: #{tpu_custom_call.1} parent=1 // pred_region
      _
    $region29: #{tpu_custom_call.1} parent=1 // pred_fallthru
      _
    // Predicated region
    $region30: #{tpu_custom_call.1} parent=1 // pred_check
      _
    $region31: #{tpu_custom_call.1} parent=1 // pred_check_branch
      %70 = sbr.rel (0) target = $region33
    $region32: #{tpu_custom_call.1} parent=1 // pred_region
      %71 = dma.done [#allocation3], 128
    $region33: #{tpu_custom_call.1} parent=1 // pred_fallthru
      _
    // Predicated region
    $region34: #{tpu_custom_call.1} parent=1 // pred_check
      _
    $region35: #{tpu_custom_call.1} parent=1 // pred_check_branch
      %73 = sbr.rel (0) target = $region37
    $region36: #{tpu_custom_call.1} parent=1 // pred_region
      %74 = dma.done [#allocation6], 32
    $region37: #{tpu_custom_call.1} parent=1 // pred_fallthru
      _
    // Predicated region
    $region38: #{tpu_custom_call.1} parent=1 // pred_check
      _
    $region39: #{tpu_custom_call.1} parent=1 // pred_check_branch
      %76 = sbr.rel (0) target = $region41
    $region40: #{tpu_custom_call.1} parent=1 // pred_region
      %77 = dma.done [#allocation6], 2048
    $region41: #{tpu_custom_call.1} parent=1 // pred_fallthru
      _
    // Predicated region
    $region42: #{tpu_custom_call.1} parent=1 // pred_check
      _
    $region43: #{tpu_custom_call.1} parent=1 // pred_check_branch
      %79 = sbr.rel (0) target = $region45
    $region44: #{tpu_custom_call.1} parent=1 // pred_region
      %80 = dma.done [#allocation9], 2048
    $region45: #{tpu_custom_call.1} parent=1 // pred_fallthru
      _
    %v81 = vld [vmem:[#allocation2] sm:$0xff]
    %v82 = vld [vmem:[#allocation5] sm:$0x3]
    %v83 = vunpack.c.0.s8 %v82
    %v84 = vcvt.s32.f32 %v83
    %v85 = vmul.f32 %v81, %v84
    %v86 = vld [vmem:[#allocation7] sm:$0xff]
    %v87 = vld [vmem:[#allocation7 + $0x8] sm:$0xff]
    %v88 = vld [vmem:[#allocation7 + $0x10] sm:$0xff]
    %v89 = vld [vmem:[#allocation7 + $0x18] sm:$0xff]
    %v90 = vld [vmem:[#allocation7 + $0x20] sm:$0xff]
    %v91 = vld [vmem:[#allocation7 + $0x28] sm:$0xff]
    %v92 = vld [vmem:[#allocation7 + $0x30] sm:$0xff]
    %v93 = vld [vmem:[#allocation7 + $0x38] sm:$0xff]
    %v94 = vld [vmem:[#allocation7 + $0x40] sm:$0xff]
    %v95 = vld [vmem:[#allocation7 + $0x48] sm:$0xff]
    %v96 = vld [vmem:[#allocation7 + $0x50] sm:$0xff]
    %v97 = vld [vmem:[#allocation7 + $0x58] sm:$0xff]
    %v98 = vld [vmem:[#allocation7 + $0x60] sm:$0xff]
    %v99 = vld [vmem:[#allocation7 + $0x68] sm:$0xff]
    %v100 = vld [vmem:[#allocation7 + $0x70] sm:$0xff]
    %v101 = vld [vmem:[#allocation7 + $0x78] sm:$0xff]
    %v102 = vld [vmem:[%s4] sm:$0x1]
    %v104 = vlaneseq
    %v105 = vshrl.u32 %v104, 7
    %v106 = vsub.s32 0, %v105
    %v107 = vrot.slane %v102, %v106
    %109 = vmatprep.subr.mxu0 0.0
    %110 = vmatpush1.msra.mxu0 %v101
    %111 = vmatprep.subr.mxu0 0.0
    %112 = vmatpush1.msra.mxu0 %v100
    %113 = vmatprep.subr.mxu0 0.0
    %114 = vmatpush1.msra.mxu0 %v99
    %115 = vmatprep.subr.mxu0 0.0
    %116 = vmatpush1.msra.mxu0 %v98
    %117 = vmatprep.subr.mxu0 0.0
    %118 = vmatpush1.msra.mxu0 %v97
    %119 = vmatprep.subr.mxu0 0.0
    %120 = vmatpush1.msra.mxu0 %v96
    %121 = vmatprep.subr.mxu0 0.0
    %122 = vmatpush1.msra.mxu0 %v95
    %123 = vmatprep.subr.mxu0 0.0
    %124 = vmatpush1.msra.mxu0 %v94
    %125 = vmatprep.subr.mxu0 0.0
    %126 = vmatpush1.msra.mxu0 %v93
    %127 = vmatprep.subr.mxu0 0.0
    %128 = vmatpush1.msra.mxu0 %v92
    %129 = vmatprep.subr.mxu0 0.0
    %130 = vmatpush1.msra.mxu0 %v91
    %131 = vmatprep.subr.mxu0 0.0
    %132 = vmatpush1.msra.mxu0 %v90
    %133 = vmatprep.subr.mxu0 0.0
    %134 = vmatpush1.msra.mxu0 %v89
    %135 = vmatprep.subr.mxu0 0.0
    %136 = vmatpush1.msra.mxu0 %v88
    %137 = vmatprep.subr.mxu0 0.0
    %138 = vmatpush1.msra.mxu0 %v87
    %139 = vmatprep.subr.mxu0 0.0
    %140 = vmatpush1.msra.mxu0 %v86
    %141 = vmatprep.subr.mxu0 0.0
    %142 = vmatpush2.msra.mxu0 0.0
    %143 = vmatprep.subr.mxu0 0.0
    %144 = vmatpush2.msra.mxu0 0.0
    %145 = vmatprep.subr.mxu0 0.0
    %146 = vmatpush2.msra.mxu0 0.0
    %147 = vmatprep.subr.mxu0 0.0
    %148 = vmatpush2.msra.mxu0 0.0
    %149 = vmatprep.subr.mxu0 0.0
    %150 = vmatpush2.msra.mxu0 0.0
    %151 = vmatprep.subr.mxu0 0.0
    %152 = vmatpush2.msra.mxu0 0.0
    %153 = vmatprep.subr.mxu0 0.0
    %154 = vmatpush2.msra.mxu0 0.0
    %155 = vmatprep.subr.mxu0 0.0
    %156 = vmatpush2.msra.mxu0 0.0
    %157 = vmatprep.subr.mxu0 0.0
    %158 = vmatpush2.msra.mxu0 0.0
    %159 = vmatprep.subr.mxu0 0.0
    %160 = vmatpush2.msra.mxu0 0.0
    %161 = vmatprep.subr.mxu0 0.0
    %162 = vmatpush2.msra.mxu0 0.0
    %163 = vmatprep.subr.mxu0 0.0
    %164 = vmatpush2.msra.mxu0 0.0
    %165 = vmatprep.subr.mxu0 0.0
    %166 = vmatpush2.msra.mxu0 0.0
    %167 = vmatprep.subr.mxu0 0.0
    %168 = vmatpush2.msra.mxu0 0.0
    %169 = vmatprep.subr.mxu0 0.0
    %170 = vmatpush2.msra.mxu0 0.0
    %171 = vmatprep.subr.mxu0 0.0
    %172 = vmatpush2.msra.mxu0 0.0
    %173 = vmatprep.mubr.f32.mxu0 0.0
    %174 = vmatmul.mubr.f32.gmra.mxu0 %v85
    %v175 = vpop.f32.mrf.mxu0
    %v176 = vadd.f32 %v107, %v175
    %v177 = vpop.f32.mrf.mxu0
    %178 = vdwg.mxu0
    %v179 = vmax.f32 %v176, 0.0
    %v180 = vld [vmem:[%s2] sm:$0x1]
    %v182 = vlaneseq
    %v183 = vshrl.u32 %v182, 7
    %v184 = vsub.s32 0, %v183
    %v185 = vrot.slane %v180, %v184
    %v187 = vadd.f32 %v179, %v185
    %188 = vst [vmem:[#allocation11] sm:$0xff] %v187
    %v189 = vld [vmem:[#allocation8] sm:$0xff]
    %v190 = vld [vmem:[#allocation8 + $0x8] sm:$0xff]
    %v191 = vld [vmem:[#allocation8 + $0x10] sm:$0xff]
    %v192 = vld [vmem:[#allocation8 + $0x18] sm:$0xff]
    %v193 = vld [vmem:[#allocation8 + $0x20] sm:$0xff]
    %v194 = vld [vmem:[#allocation8 + $0x28] sm:$0xff]
    %v195 = vld [vmem:[#allocation8 + $0x30] sm:$0xff]
    %v196 = vld [vmem:[#allocation8 + $0x38] sm:$0xff]
    %v197 = vld [vmem:[#allocation8 + $0x40] sm:$0xff]
    %v198 = vld [vmem:[#allocation8 + $0x48] sm:$0xff]
    %v199 = vld [vmem:[#allocation8 + $0x50] sm:$0xff]
    %v200 = vld [vmem:[#allocation8 + $0x58] sm:$0xff]
    %v201 = vld [vmem:[#allocation8 + $0x60] sm:$0xff]
    %v202 = vld [vmem:[#allocation8 + $0x68] sm:$0xff]
    %v203 = vld [vmem:[#allocation8 + $0x70] sm:$0xff]
    %v204 = vld [vmem:[#allocation8 + $0x78] sm:$0xff]
    %v205 = vld [vmem:[%s6] sm:$0x1]
    %v207 = vlaneseq
    %v208 = vshrl.u32 %v207, 7
    %v209 = vsub.s32 0, %v208
    %v210 = vrot.slane %v205, %v209
    %212 = vmatprep.subr.mxu0 0.0
    %213 = vmatpush1.msra.mxu0 %v204
    %214 = vmatprep.subr.mxu0 0.0
    %215 = vmatpush1.msra.mxu0 %v203
    %216 = vmatprep.subr.mxu0 0.0
    %217 = vmatpush1.msra.mxu0 %v202
    %218 = vmatprep.subr.mxu0 0.0
    %219 = vmatpush1.msra.mxu0 %v201
    %220 = vmatprep.subr.mxu0 0.0
    %221 = vmatpush1.msra.mxu0 %v200
    %222 = vmatprep.subr.mxu0 0.0
    %223 = vmatpush1.msra.mxu0 %v199
    %224 = vmatprep.subr.mxu0 0.0
    %225 = vmatpush1.msra.mxu0 %v198
    %226 = vmatprep.subr.mxu0 0.0
    %227 = vmatpush1.msra.mxu0 %v197
    %228 = vmatprep.subr.mxu0 0.0
    %229 = vmatpush1.msra.mxu0 %v196
    %230 = vmatprep.subr.mxu0 0.0
    %231 = vmatpush1.msra.mxu0 %v195
    %232 = vmatprep.subr.mxu0 0.0
    %233 = vmatpush1.msra.mxu0 %v194
    %234 = vmatprep.subr.mxu0 0.0
    %235 = vmatpush1.msra.mxu0 %v193
    %236 = vmatprep.subr.mxu0 0.0
    %237 = vmatpush1.msra.mxu0 %v192
    %238 = vmatprep.subr.mxu0 0.0
    %239 = vmatpush1.msra.mxu0 %v191
    %240 = vmatprep.subr.mxu0 0.0
    %241 = vmatpush1.msra.mxu0 %v190
    %242 = vmatprep.subr.mxu0 0.0
    %243 = vmatpush1.msra.mxu0 %v189
    %244 = vmatprep.subr.mxu0 0.0
    %245 = vmatpush2.msra.mxu0 0.0
    %246 = vmatprep.subr.mxu0 0.0
    %247 = vmatpush2.msra.mxu0 0.0
    %248 = vmatprep.subr.mxu0 0.0
    %249 = vmatpush2.msra.mxu0 0.0
    %250 = vmatprep.subr.mxu0 0.0
    %251 = vmatpush2.msra.mxu0 0.0
    %252 = vmatprep.subr.mxu0 0.0
    %253 = vmatpush2.msra.mxu0 0.0
    %254 = vmatprep.subr.mxu0 0.0
    %255 = vmatpush2.msra.mxu0 0.0
    %256 = vmatprep.subr.mxu0 0.0
    %257 = vmatpush2.msra.mxu0 0.0
    %258 = vmatprep.subr.mxu0 0.0
    %259 = vmatpush2.msra.mxu0 0.0
    %260 = vmatprep.subr.mxu0 0.0
    %261 = vmatpush2.msra.mxu0 0.0
    %262 = vmatprep.subr.mxu0 0.0
    %263 = vmatpush2.msra.mxu0 0.0
    %264 = vmatprep.subr.mxu0 0.0
    %265 = vmatpush2.msra.mxu0 0.0
    %266 = vmatprep.subr.mxu0 0.0
    %267 = vmatpush2.msra.mxu0 0.0
    %268 = vmatprep.subr.mxu0 0.0
    %269 = vmatpush2.msra.mxu0 0.0
    %270 = vmatprep.subr.mxu0 0.0
    %271 = vmatpush2.msra.mxu0 0.0
    %272 = vmatprep.subr.mxu0 0.0
    %273 = vmatpush2.msra.mxu0 0.0
    %274 = vmatprep.subr.mxu0 0.0
    %275 = vmatpush2.msra.mxu0 0.0
    %276 = vmatprep.mubr.f32.mxu0 0.0
    %277 = vmatmul.mubr.f32.gmra.mxu0 %v187
    %v278 = vpop.f32.mrf.mxu0
    %v279 = vadd.f32 %v210, %v278
    %v280 = vpop.f32.mrf.mxu0
    %281 = vdwg.mxu0
    %282 = vst [vmem:[#allocation10] sm:$0xff] %v279
    // Predicated region
    $region46: #{tpu_custom_call.1} parent=1 // pred_check
      _
    $region47: #{tpu_custom_call.1} parent=1 // pred_check_branch
      %284 = sbr.rel (0) target = $region49
    $region48: #{tpu_custom_call.1} parent=1 // pred_region
      %s286 = ssub.s32 128, 128
      %287 = vsyncadd [#allocation4], %s286
      %s289 = sshll.u32 [#allocation10], 4
      %s290 = int_to_ptr.vmem [resolvable:$true] %s289
      %292 = dma.vmem_to_hbm [thread:$0]  %s290, 128, %s7, [#allocation4]
    $region49: #{tpu_custom_call.1} parent=1 // pred_fallthru
      _
    // Predicated region
    $region50: #{tpu_custom_call.1} parent=1 // pred_check
      _
    $region51: #{tpu_custom_call.1} parent=1 // pred_check_branch
      %294 = sbr.rel (0) target = $region53
    $region52: #{tpu_custom_call.1} parent=1 // pred_region
      %s296 = ssub.s32 128, 128
      %297 = vsyncadd [#allocation12], %s296
      %s299 = sshll.u32 [#allocation11], 4
      %s300 = int_to_ptr.vmem [resolvable:$true] %s299
      %302 = dma.vmem_to_hbm [thread:$0]  %s300, 128, %s8, [#allocation12]
    $region53: #{tpu_custom_call.1} parent=1 // pred_fallthru
      _
    // Predicated region
    $region54: #{tpu_custom_call.1} parent=1 // pred_check
      _
    $region55: #{tpu_custom_call.1} parent=1 // pred_check_branch
      %304 = sbr.rel (0) target = $region57
    $region56: #{tpu_custom_call.1} parent=1 // pred_region
      %305 = dma.done [#allocation4], 128
    $region57: #{tpu_custom_call.1} parent=1 // pred_fallthru
      _
    // Predicated region
    $region58: #{tpu_custom_call.1} parent=1 // pred_check
      _
    $region59: #{tpu_custom_call.1} parent=1 // pred_check_branch
      %307 = sbr.rel (0) target = $region61
    $region60: #{tpu_custom_call.1} parent=1 // pred_region
      %308 = dma.done [#allocation12], 128
    $region61: #{tpu_custom_call.1} parent=1 // pred_fallthru
      _
    %309 = vsyncpa [#allocation3], 1
    %310 = vsyncpa [#allocation6], 1
    %311 = vsyncpa [#allocation9], 1
    %312 = vsyncpa [#allocation4], 1
    %313 = vsyncpa [#allocation12], 1

// kernel: tpu_custom_call.1
$region0: #{tpu_custom_call.1}
  #allocation0 [shape = 'u32[]', space=smem, size = 0x4, offset = 0x4, fixed_abs, tag = 'smem constant byte address 0x4 - core index']
  #allocation1 [shape = 'u32[144,128]{1,0:T(1,128)}', space=vmem, size = 0x12000, scoped, tag = 'internal scratch']
  %s0 = inlined_call_operand.hbm [shape: f32[8,128], index: 0, kind: input, shape index: {}]
  %s1 = inlined_call_operand.hbm [shape: s8[8,128], index: 1, kind: input, shape index: {}]
  %s2 = inlined_call_operand.vmem [shape: f32[1,128], index: 2, kind: input, shape index: {}]
  %s3 = inlined_call_operand.hbm [shape: f32[128,128], index: 3, kind: input, shape index: {}]
  %s4 = inlined_call_operand.vmem [shape: f32[1,128], index: 4, kind: input, shape index: {}]
  %s5 = inlined_call_operand.hbm [shape: f32[128,128], index: 5, kind: input, shape index: {}]
  %s6 = inlined_call_operand.vmem [shape: f32[1,128], index: 6, kind: input, shape index: {}]
  %s7 = inlined_call_operand.hbm [shape: f32[8,128], index: 7, kind: output, shape index: {0}]
  %s8 = inlined_call_operand.hbm [shape: f32[8,128], index: 8, kind: output, shape index: {1}]
  %9 = xla_tuple %s7, %s8
  %s10 = sld [smem:[#allocation0]]
  $region62: #{tpu_custom_call.1} parent=0
    _
  %s12 = ssub.s32 1, %s10
  %s13 = scalar_select 0, %s12, %s10
  $region1: #{tpu_custom_call.1} parent=0
    #allocation2 [shape = 'u8[4096]{0}', space=vmem, size = 0x1000, scoped, tag = 'input window, operand 0, single buffered']
    #allocation3 [shape = 's32[1]{0}', space=sflag, size = 0x4, scoped, tag = 'scoped memory for tpu_custom_call.1']
    #allocation4 [shape = 's32[1]{0}', space=sflag, size = 0x4, scoped, tag = 'scoped memory for tpu_custom_call.1']
    #allocation5 [shape = 'u8[1024]{0}', space=vmem, size = 0x400, scoped, tag = 'input window, operand 1, single buffered']
    #allocation6 [shape = 's32[1]{0}', space=sflag, size = 0x4, scoped, tag = 'scoped memory for tpu_custom_call.1']
    #allocation7 [shape = 'u8[65536]{0}', space=vmem, size = 0x10000, scoped, tag = 'input window, operand 3, single buffered']
    #allocation8 [shape = 'u8[65536]{0}', space=vmem, size = 0x10000, scoped, tag = 'input window, operand 5, single buffered']
    #allocation9 [shape = 's32[1]{0}', space=sflag, size = 0x4, scoped, tag = 'scoped memory for tpu_custom_call.1']
    #allocation10 [shape = 'u8[4096]{0}', space=vmem, size = 0x1000, scoped, tag = 'output window, operand 0, single buffered']
    #allocation11 [shape = 'u8[4096]{0}', space=vmem, size = 0x1000, scoped, tag = 'output window, operand 1, single buffered']
    #allocation12 [shape = 's32[1]{0}', space=sflag, size = 0x4, scoped, tag = 'scoped memory for tpu_custom_call.1']
    %14 = vsyncpa [#allocation3], 0
    %15 = vsyncpa [#allocation6], 0
    %16 = vsyncpa [#allocation9], 0
    %17 = vsyncpa [#allocation4], 0
    %18 = vsyncpa [#allocation12], 0
    // Predicated region
    $region2: #{tpu_custom_call.1} parent=1 // pred_check
      _
    $region3: #{tpu_custom_call.1} parent=1 // pred_check_branch
      %20 = sbr.rel (0) target = $region5
    $region4: #{tpu_custom_call.1} parent=1 // pred_region
      %s22 = ssub.s32 128, 128
      %23 = vsyncadd [#allocation3], %s22
      %s25 = sshll.u32 [#allocation2], 4
      %s26 = int_to_ptr.vmem [resolvable:$true] %s25
      %28 = dma.hbm_to_vmem [thread:$0]  %s0, 128, %s26, [#allocation3]
    $region5: #{tpu_custom_call.1} parent=1 // pred_fallthru
      _
    // Predicated region
    $region6: #{tpu_custom_call.1} parent=1 // pred_check
      _
    $region7: #{tpu_custom_call.1} parent=1 // pred_check_branch
      %30 = sbr.rel (0) target = $region9
    $region8: #{tpu_custom_call.1} parent=1 // pred_region
      %s32 = ssub.s32 32, 32
      %33 = vsyncadd [#allocation6], %s32
      %s35 = sshll.u32 [#allocation5], 4
      %s36 = int_to_ptr.vmem [resolvable:$true] %s35
      %38 = dma.hbm_to_vmem [thread:$0]  %s1, 32, %s36, [#allocation6]
    $region9: #{tpu_custom_call.1} parent=1 // pred_fallthru
      _
    // Predicated region
    $region10: #{tpu_custom_call.1} parent=1 // pred_check
      _
    $region11: #{tpu_custom_call.1} parent=1 // pred_check_branch
      %40 = sbr.rel (0) target = $region13
    $region12: #{tpu_custom_call.1} parent=1 // pred_region
      _
    $region13: #{tpu_custom_call.1} parent=1 // pred_fallthru
      _
    // Predicated region
    $region14: #{tpu_custom_call.1} parent=1 // pred_check
      _
    $region15: #{tpu_custom_call.1} parent=1 // pred_check_branch
      %42 = sbr.rel (0) target = $region17
    $region16: #{tpu_custom_call.1} parent=1 // pred_region
      %s44 = ssub.s32 2048, 2048
      %45 = vsyncadd [#allocation6], %s44
      %s46 = sshll.u32 [#allocation7], 4
      %s47 = int_to_ptr.vmem [resolvable:$true] %s46
      %52 = dma.hbm_to_vmem [thread:$0]  %s3, 2048, %s47, [#allocation6], 128, 128, 8
    $region17: #{tpu_custom_call.1} parent=1 // pred_fallthru
      _
    // Predicated region
    $region18: #{tpu_custom_call.1} parent=1 // pred_check
      _
    $region19: #{tpu_custom_call.1} parent=1 // pred_check_branch
      %54 = sbr.rel (0) target = $region21
    $region20: #{tpu_custom_call.1} parent=1 // pred_region
      _
    $region21: #{tpu_custom_call.1} parent=1 // pred_fallthru
      _
    // Predicated region
    $region22: #{tpu_custom_call.1} parent=1 // pred_check
      _
    $region23: #{tpu_custom_call.1} parent=1 // pred_check_branch
      %56 = sbr.rel (0) target = $region25
    $region24: #{tpu_custom_call.1} parent=1 // pred_region
      %s58 = ssub.s32 2048, 2048
      %59 = vsyncadd [#allocation9], %s58
      %s60 = sshll.u32 [#allocation8], 4
      %s61 = int_to_ptr.vmem [resolvable:$true] %s60
      %66 = dma.hbm_to_vmem [thread:$0]  %s5, 2048, %s61, [#allocation9], 128, 128, 8
    $region25: #{tpu_custom_call.1} parent=1 // pred_fallthru
      _
    // Predicated region
    $region26: #{tpu_custom_call.1} parent=1 // pred_check
      _
    $region27: #{tpu_custom_call.1} parent=1 // pred_check_branch
      %68 = sbr.rel (0) target = $region29
    $region28: #{tpu_custom_call.1} parent=1 // pred_region
      _
    $region29: #{tpu_custom_call.1} parent=1 // pred_fallthru
      _
    // Predicated region
    $region30: #{tpu_custom_call.1} parent=1 // pred_check
      _
    $region31: #{tpu_custom_call.1} parent=1 // pred_check_branch
      %70 = sbr.rel (0) target = $region33
    $region32: #{tpu_custom_call.1} parent=1 // pred_region
      %71 = dma.done [#allocation3], 128
    $region33: #{tpu_custom_call.1} parent=1 // pred_fallthru
      _
    // Predicated region
    $region34: #{tpu_custom_call.1} parent=1 // pred_check
      _
    $region35: #{tpu_custom_call.1} parent=1 // pred_check_branch
      %73 = sbr.rel (0) target = $region37
    $region36: #{tpu_custom_call.1} parent=1 // pred_region
      %74 = dma.done [#allocation6], 32
    $region37: #{tpu_custom_call.1} parent=1 // pred_fallthru
      _
    // Predicated region
    $region38: #{tpu_custom_call.1} parent=1 // pred_check
      _
    $region39: #{tpu_custom_call.1} parent=1 // pred_check_branch
      %76 = sbr.rel (0) target = $region41
    $region40: #{tpu_custom_call.1} parent=1 // pred_region
      %77 = dma.done [#allocation6], 2048
    $region41: #{tpu_custom_call.1} parent=1 // pred_fallthru
      _
    // Predicated region
    $region42: #{tpu_custom_call.1} parent=1 // pred_check
      _
    $region43: #{tpu_custom_call.1} parent=1 // pred_check_branch
      %79 = sbr.rel (0) target = $region45
    $region44: #{tpu_custom_call.1} parent=1 // pred_region
      %80 = dma.done [#allocation9], 2048
    $region45: #{tpu_custom_call.1} parent=1 // pred_fallthru
      _
    %v81 = vld [vmem:[#allocation2] sm:$0xff]
    %v82 = vld [vmem:[#allocation5] sm:$0x3]
    %v83 = vunpack.c.0.s8 %v82
    %v84 = vcvt.s32.f32 %v83
    %v85 = vmul.f32 %v81, %v84
    %v86 = vld [vmem:[#allocation7] sm:$0xff]
    %v87 = vld [vmem:[#allocation7 + $0x8] sm:$0xff]
    %v88 = vld [vmem:[#allocation7 + $0x10] sm:$0xff]
    %v89 = vld [vmem:[#allocation7 + $0x18] sm:$0xff]
    %v90 = vld [vmem:[#allocation7 + $0x20] sm:$0xff]
    %v91 = vld [vmem:[#allocation7 + $0x28] sm:$0xff]
    %v92 = vld [vmem:[#allocation7 + $0x30] sm:$0xff]
    %v93 = vld [vmem:[#allocation7 + $0x38] sm:$0xff]
    %v94 = vld [vmem:[#allocation7 + $0x40] sm:$0xff]
    %v95 = vld [vmem:[#allocation7 + $0x48] sm:$0xff]
    %v96 = vld [vmem:[#allocation7 + $0x50] sm:$0xff]
    %v97 = vld [vmem:[#allocation7 + $0x58] sm:$0xff]
    %v98 = vld [vmem:[#allocation7 + $0x60] sm:$0xff]
    %v99 = vld [vmem:[#allocation7 + $0x68] sm:$0xff]
    %v100 = vld [vmem:[#allocation7 + $0x70] sm:$0xff]
    %v101 = vld [vmem:[#allocation7 + $0x78] sm:$0xff]
    %v102 = vld [vmem:[%s4] sm:$0x1]
    %v104 = vlaneseq
    %v105 = vshrl.u32 %v104, 7
    %v106 = vsub.s32 0, %v105
    %v107 = vrot.slane %v102, %v106
    %109 = vmatprep.subr.mxu0 0.0
    %110 = vmatpush1.msra.mxu0 %v101
    %111 = vmatprep.subr.mxu0 0.0
    %112 = vmatpush1.msra.mxu0 %v100
    %113 = vmatprep.subr.mxu0 0.0
    %114 = vmatpush1.msra.mxu0 %v99
    %115 = vmatprep.subr.mxu0 0.0
    %116 = vmatpush1.msra.mxu0 %v98
    %117 = vmatprep.subr.mxu0 0.0
    %118 = vmatpush1.msra.mxu0 %v97
    %119 = vmatprep.subr.mxu0 0.0
    %120 = vmatpush1.msra.mxu0 %v96
    %121 = vmatprep.subr.mxu0 0.0
    %122 = vmatpush1.msra.mxu0 %v95
    %123 = vmatprep.subr.mxu0 0.0
    %124 = vmatpush1.msra.mxu0 %v94
    %125 = vmatprep.subr.mxu0 0.0
    %126 = vmatpush1.msra.mxu0 %v93
    %127 = vmatprep.subr.mxu0 0.0
    %128 = vmatpush1.msra.mxu0 %v92
    %129 = vmatprep.subr.mxu0 0.0
    %130 = vmatpush1.msra.mxu0 %v91
    %131 = vmatprep.subr.mxu0 0.0
    %132 = vmatpush1.msra.mxu0 %v90
    %133 = vmatprep.subr.mxu0 0.0
    %134 = vmatpush1.msra.mxu0 %v89
    %135 = vmatprep.subr.mxu0 0.0
    %136 = vmatpush1.msra.mxu0 %v88
    %137 = vmatprep.subr.mxu0 0.0
    %138 = vmatpush1.msra.mxu0 %v87
    %139 = vmatprep.subr.mxu0 0.0
    %140 = vmatpush1.msra.mxu0 %v86
    %141 = vmatprep.subr.mxu0 0.0
    %142 = vmatpush2.msra.mxu0 0.0
    %143 = vmatprep.subr.mxu0 0.0
    %144 = vmatpush2.msra.mxu0 0.0
    %145 = vmatprep.subr.mxu0 0.0
    %146 = vmatpush2.msra.mxu0 0.0
    %147 = vmatprep.subr.mxu0 0.0
    %148 = vmatpush2.msra.mxu0 0.0
    %149 = vmatprep.subr.mxu0 0.0
    %150 = vmatpush2.msra.mxu0 0.0
    %151 = vmatprep.subr.mxu0 0.0
    %152 = vmatpush2.msra.mxu0 0.0
    %153 = vmatprep.subr.mxu0 0.0
    %154 = vmatpush2.msra.mxu0 0.0
    %155 = vmatprep.subr.mxu0 0.0
    %156 = vmatpush2.msra.mxu0 0.0
    %157 = vmatprep.subr.mxu0 0.0
    %158 = vmatpush2.msra.mxu0 0.0
    %159 = vmatprep.subr.mxu0 0.0
    %160 = vmatpush2.msra.mxu0 0.0
    %161 = vmatprep.subr.mxu0 0.0
    %162 = vmatpush2.msra.mxu0 0.0
    %163 = vmatprep.subr.mxu0 0.0
    %164 = vmatpush2.msra.mxu0 0.0
    %165 = vmatprep.subr.mxu0 0.0
    %166 = vmatpush2.msra.mxu0 0.0
    %167 = vmatprep.subr.mxu0 0.0
    %168 = vmatpush2.msra.mxu0 0.0
    %169 = vmatprep.subr.mxu0 0.0
    %170 = vmatpush2.msra.mxu0 0.0
    %171 = vmatprep.subr.mxu0 0.0
    %172 = vmatpush2.msra.mxu0 0.0
    %173 = vmatprep.mubr.f32.mxu0 0.0
    %174 = vmatmul.mubr.f32.gmra.mxu0 %v85
    %v175 = vpop.f32.mrf.mxu0
    %v176 = vadd.f32 %v107, %v175
    %v177 = vpop.f32.mrf.mxu0
    %178 = vdwg.mxu0
    %v179 = vmax.f32 %v176, 0.0
    %v180 = vld [vmem:[%s2] sm:$0x1]
    %v182 = vlaneseq
    %v183 = vshrl.u32 %v182, 7
    %v184 = vsub.s32 0, %v183
    %v185 = vrot.slane %v180, %v184
    %v187 = vadd.f32 %v179, %v185
    %188 = vst [vmem:[#allocation11] sm:$0xff] %v187
    %v189 = vld [vmem:[#allocation8] sm:$0xff]
    %v190 = vld [vmem:[#allocation8 + $0x8] sm:$0xff]
    %v191 = vld [vmem:[#allocation8 + $0x10] sm:$0xff]
    %v192 = vld [vmem:[#allocation8 + $0x18] sm:$0xff]
    %v193 = vld [vmem:[#allocation8 + $0x20] sm:$0xff]
    %v194 = vld [vmem:[#allocation8 + $0x28] sm:$0xff]
    %v195 = vld [vmem:[#allocation8 + $0x30] sm:$0xff]
    %v196 = vld [vmem:[#allocation8 + $0x38] sm:$0xff]
    %v197 = vld [vmem:[#allocation8 + $0x40] sm:$0xff]
    %v198 = vld [vmem:[#allocation8 + $0x48] sm:$0xff]
    %v199 = vld [vmem:[#allocation8 + $0x50] sm:$0xff]
    %v200 = vld [vmem:[#allocation8 + $0x58] sm:$0xff]
    %v201 = vld [vmem:[#allocation8 + $0x60] sm:$0xff]
    %v202 = vld [vmem:[#allocation8 + $0x68] sm:$0xff]
    %v203 = vld [vmem:[#allocation8 + $0x70] sm:$0xff]
    %v204 = vld [vmem:[#allocation8 + $0x78] sm:$0xff]
    %v205 = vld [vmem:[%s6] sm:$0x1]
    %v207 = vlaneseq
    %v208 = vshrl.u32 %v207, 7
    %v209 = vsub.s32 0, %v208
    %v210 = vrot.slane %v205, %v209
    %212 = vmatprep.subr.mxu0 0.0
    %213 = vmatpush1.msra.mxu0 %v204
    %214 = vmatprep.subr.mxu0 0.0
    %215 = vmatpush1.msra.mxu0 %v203
    %216 = vmatprep.subr.mxu0 0.0
    %217 = vmatpush1.msra.mxu0 %v202
    %218 = vmatprep.subr.mxu0 0.0
    %219 = vmatpush1.msra.mxu0 %v201
    %220 = vmatprep.subr.mxu0 0.0
    %221 = vmatpush1.msra.mxu0 %v200
    %222 = vmatprep.subr.mxu0 0.0
    %223 = vmatpush1.msra.mxu0 %v199
    %224 = vmatprep.subr.mxu0 0.0
    %225 = vmatpush1.msra.mxu0 %v198
    %226 = vmatprep.subr.mxu0 0.0
    %227 = vmatpush1.msra.mxu0 %v197
    %228 = vmatprep.subr.mxu0 0.0
    %229 = vmatpush1.msra.mxu0 %v196
    %230 = vmatprep.subr.mxu0 0.0
    %231 = vmatpush1.msra.mxu0 %v195
    %232 = vmatprep.subr.mxu0 0.0
    %233 = vmatpush1.msra.mxu0 %v194
    %234 = vmatprep.subr.mxu0 0.0
    %235 = vmatpush1.msra.mxu0 %v193
    %236 = vmatprep.subr.mxu0 0.0
    %237 = vmatpush1.msra.mxu0 %v192
    %238 = vmatprep.subr.mxu0 0.0
    %239 = vmatpush1.msra.mxu0 %v191
    %240 = vmatprep.subr.mxu0 0.0
    %241 = vmatpush1.msra.mxu0 %v190
    %242 = vmatprep.subr.mxu0 0.0
    %243 = vmatpush1.msra.mxu0 %v189
    %244 = vmatprep.subr.mxu0 0.0
    %245 = vmatpush2.msra.mxu0 0.0
    %246 = vmatprep.subr.mxu0 0.0
    %247 = vmatpush2.msra.mxu0 0.0
    %248 = vmatprep.subr.mxu0 0.0
    %249 = vmatpush2.msra.mxu0 0.0
    %250 = vmatprep.subr.mxu0 0.0
    %251 = vmatpush2.msra.mxu0 0.0
    %252 = vmatprep.subr.mxu0 0.0
    %253 = vmatpush2.msra.mxu0 0.0
    %254 = vmatprep.subr.mxu0 0.0
    %255 = vmatpush2.msra.mxu0 0.0
    %256 = vmatprep.subr.mxu0 0.0
    %257 = vmatpush2.msra.mxu0 0.0
    %258 = vmatprep.subr.mxu0 0.0
    %259 = vmatpush2.msra.mxu0 0.0
    %260 = vmatprep.subr.mxu0 0.0
    %261 = vmatpush2.msra.mxu0 0.0
    %262 = vmatprep.subr.mxu0 0.0
    %263 = vmatpush2.msra.mxu0 0.0
    %264 = vmatprep.subr.mxu0 0.0
    %265 = vmatpush2.msra.mxu0 0.0
    %266 = vmatprep.subr.mxu0 0.0
    %267 = vmatpush2.msra.mxu0 0.0
    %268 = vmatprep.subr.mxu0 0.0
    %269 = vmatpush2.msra.mxu0 0.0
    %270 = vmatprep.subr.mxu0 0.0
    %271 = vmatpush2.msra.mxu0 0.0
    %272 = vmatprep.subr.mxu0 0.0
    %273 = vmatpush2.msra.mxu0 0.0
    %274 = vmatprep.subr.mxu0 0.0
    %275 = vmatpush2.msra.mxu0 0.0
    %276 = vmatprep.mubr.f32.mxu0 0.0
    %277 = vmatmul.mubr.f32.gmra.mxu0 %v187
    %v278 = vpop.f32.mrf.mxu0
    %v279 = vadd.f32 %v210, %v278
    %v280 = vpop.f32.mrf.mxu0
    %281 = vdwg.mxu0
    %282 = vst [vmem:[#allocation10] sm:$0xff] %v279
    // Predicated region
    $region46: #{tpu_custom_call.1} parent=1 // pred_check
      _
    $region47: #{tpu_custom_call.1} parent=1 // pred_check_branch
      %284 = sbr.rel (0) target = $region49
    $region48: #{tpu_custom_call.1} parent=1 // pred_region
      %s286 = ssub.s32 128, 128
      %287 = vsyncadd [#allocation4], %s286
      %s289 = sshll.u32 [#allocation10], 4
      %s290 = int_to_ptr.vmem [resolvable:$true] %s289
      %292 = dma.vmem_to_hbm [thread:$0]  %s290, 128, %s7, [#allocation4]
    $region49: #{tpu_custom_call.1} parent=1 // pred_fallthru
      _
    // Predicated region
    $region50: #{tpu_custom_call.1} parent=1 // pred_check
      _
    $region51: #{tpu_custom_call.1} parent=1 // pred_check_branch
      %294 = sbr.rel (0) target = $region53
    $region52: #{tpu_custom_call.1} parent=1 // pred_region
      %s296 = ssub.s32 128, 128
      %297 = vsyncadd [#allocation12], %s296
      %s299 = sshll.u32 [#allocation11], 4
      %s300 = int_to_ptr.vmem [resolvable:$true] %s299
      %302 = dma.vmem_to_hbm [thread:$0]  %s300, 128, %s8, [#allocation12]
    $region53: #{tpu_custom_call.1} parent=1 // pred_fallthru
      _
    // Predicated region
    $region54: #{tpu_custom_call.1} parent=1 // pred_check
      _
    $region55: #{tpu_custom_call.1} parent=1 // pred_check_branch
      %304 = sbr.rel (0) target = $region57
    $region56: #{tpu_custom_call.1} parent=1 // pred_region
      %305 = dma.done [#allocation4], 128
    $region57: #{tpu_custom_call.1} parent=1 // pred_fallthru
      _
    // Predicated region
    $region58: #{tpu_custom_call.1} parent=1 // pred_check
      _
    $region59: #{tpu_custom_call.1} parent=1 // pred_check_branch
      %307 = sbr.rel (0) target = $region61
    $region60: #{tpu_custom_call.1} parent=1 // pred_region
      %308 = dma.done [#allocation12], 128
    $region61: #{tpu_custom_call.1} parent=1 // pred_fallthru
      _
    %309 = vsyncpa [#allocation3], 1
    %310 = vsyncpa [#allocation6], 1
    %311 = vsyncpa [#allocation9], 1
    %312 = vsyncpa [#allocation4], 1
    %313 = vsyncpa [#allocation12], 1

</llo_original>
